<compile_context>
chip_gen: v7x
topology: tpu7x:2x2x1
jax: 0.10.0
libtpu: 0.0.40
codegen_flags: <defaults>
</compile_context>

<pallas_src>
import jax
import jax.numpy as jnp
from jax.experimental import pallas as pl
from jax.experimental.pallas import tpu as pltpu


def _round_up(v, m):
    return ((v + m - 1) // m) * m


def _choose_tm(HW, F_g, F_l, itemsize, *, tm_max, vmem_budget):
    """Largest pixel tile (multiple of 128) whose double-buffered streamed
    tiles (g in, x in, out) fit in `vmem_budget` bytes."""
    per_pixel = 2 * (F_g + 2 * F_l) * itemsize          # 2x = double buffering
    tm = min(tm_max, max(128, vmem_budget // max(per_pixel, 1)))
    tm = max(128, (tm // 128) * 128)                     # keep lanes aligned
    tm = min(tm, _round_up(HW, 128))                     # don't exceed pixel extent
    return int(tm)


def _make_kernel(F_g, fused):
    def kernel(g_ref, x_ref, w_ref, b_ref, wpsi_ref, bpsi_ref, out_ref):
        # g_ref: (F_g, tm)  x_ref: (F_l, tm)   -- channels on sublanes, pixels on lanes
        g = g_ref[...]
        x = x_ref[...]
        if fused:
            # One MXU pass with K = F_g + F_l.
            gx = jnp.concatenate([g, x], axis=0)                         # (F_g+F_l, tm)
            a = jnp.dot(w_ref[...], gx, preferred_element_type=jnp.float32)
        else:
            # Fallback for channel counts not aligned to the sublane tile.
            w = w_ref[...]
            a = (jnp.dot(w[:, :F_g], g, preferred_element_type=jnp.float32)
                 + jnp.dot(w[:, F_g:], x, preferred_element_type=jnp.float32))
        a = jnp.maximum(a + b_ref[...], 0.0)                             # (F_int, tm)
        # Lane-dense psi: (1, F_int) @ (F_int, tm) -> (1, tm)
        p = jnp.dot(wpsi_ref[...], a, preferred_element_type=jnp.float32)
        psi = jax.nn.sigmoid(p + bpsi_ref[0, 0])                         # (1, tm)
        out_ref[...] = (x.astype(jnp.float32) * psi).astype(out_ref.dtype)

    return kernel


def attention_block(g, x, params, *, tm=2048, vmem_tile_budget=12 * (1 << 20)):
    """g: (N, F_g, H, W), x: (N, F_l, H, W)  (NCHW, like PyTorch).
    Returns x * psi with shape (N, F_l, H, W)."""
    wg, bg, wx, bx, wpsi, bpsi = params      # torch layout: (out_ch, in_ch), (out_ch,)
    N, F_g, H, W = g.shape
    _, F_l, _, _ = x.shape
    F_int = wg.shape[0]
    HW = H * W

    # Trace-time weight prep (tiny, no activation HBM traffic).
    w_fused = jnp.concatenate([wg, wx], axis=1)          # (F_int, F_g + F_l)
    b_fused = (bg + bx).reshape(F_int, 1)                # (F_int, 1)
    wpsi_row = wpsi.reshape(1, F_int)                    # (1, F_int)
    bpsi_s = bpsi.reshape(1, 1)                          # SMEM scalar

    # NCHW -> (N, C, H*W): collapses trailing dims only (no transpose).
    g3 = g.reshape(N, F_g, HW)
    x3 = x.reshape(N, F_l, HW)

    itemsize = jnp.dtype(x.dtype).itemsize
    tm_eff = _choose_tm(HW, F_g, F_l, itemsize, tm_max=tm, vmem_budget=vmem_tile_budget)
    grid_m = pl.cdiv(HW, tm_eff)

    # In-kernel channel concat is only used when both channel counts are
    # aligned to the native sublane tile for this dtype (always true for the
    # demo); otherwise fall back to two dots against the same fused weight.
    sublane = {4: 8, 2: 16, 1: 32}.get(itemsize, 8)
    fused = (F_g % sublane == 0) and (F_l % sublane == 0)

    out3 = pl.pallas_call(
        _make_kernel(F_g, fused),
        out_shape=jax.ShapeDtypeStruct((N, F_l, HW), x.dtype),
        grid=(N, grid_m),
        in_specs=[
            pl.BlockSpec((None, F_g, tm_eff), lambda n, j: (n, 0, j)),
            pl.BlockSpec((None, F_l, tm_eff), lambda n, j: (n, 0, j)),
            pl.BlockSpec((F_int, F_g + F_l), lambda n, j: (0, 0)),
            pl.BlockSpec((F_int, 1), lambda n, j: (0, 0)),
            pl.BlockSpec((1, F_int), lambda n, j: (0, 0)),
            pl.BlockSpec(memory_space=pltpu.MemorySpace.SMEM),   # bpsi scalar
        ],
        out_specs=pl.BlockSpec((None, F_l, tm_eff), lambda n, j: (n, 0, j)),
        compiler_params=pltpu.CompilerParams(
            dimension_semantics=("parallel", "parallel")),
    )(g3, x3, w_fused, b_fused, wpsi_row, bpsi_s)

    return out3.reshape(N, F_l, H, W)


def init_params(key, F_g, F_l, F_int, dtype=jnp.float32):
    """Deterministic synthetic init with PyTorch Conv2d layout:
    weights are (out_ch, in_ch) (1x1 kernel squeezed), biases are (out_ch,)."""
    k1, k2, k3, k4, k5, k6 = jax.random.split(key, 6)
    wg = jax.random.normal(k1, (F_int, F_g), dtype) * 0.1
    bg = jax.random.normal(k2, (F_int,), dtype) * 0.1
    wx = jax.random.normal(k3, (F_int, F_l), dtype) * 0.1
    bx = jax.random.normal(k4, (F_int,), dtype) * 0.1
    wpsi = jax.random.normal(k5, (1, F_int), dtype) * 0.1
    bpsi = jax.random.normal(k6, (1,), dtype) * 0.1
    return wg, bg, wx, bx, wpsi, bpsi


def reference(g, x, params):
    """Pure-JAX reference matching the PyTorch forward (NCHW)."""
    wg, bg, wx, bx, wpsi, bpsi = params
    g1 = jnp.einsum('nchw,oc->nohw', g, wg) + bg[None, :, None, None]
    x1 = jnp.einsum('nchw,oc->nohw', x, wx) + bx[None, :, None, None]
    a = jnp.maximum(g1 + x1, 0.0)
    p = jnp.einsum('nchw,oc->nohw', a, wpsi) + bpsi[None, :, None, None]
    psi = jax.nn.sigmoid(p)
    return x * psi


if __name__ == "__main__":
    key = jax.random.PRNGKey(0)
    kp, kg, kx = jax.random.split(key, 3)

    N, F_g, F_l, F_int, H, W = 2, 8, 8, 16, 16, 16
    params = init_params(kp, F_g, F_l, F_int)
    g = jax.random.normal(kg, (N, F_g, H, W), jnp.float32)
    x = jax.random.normal(kx, (N, F_l, H, W), jnp.float32)

    out = attention_block(g, x, params)
    out = jax.block_until_ready(out)

    ref = reference(g, x, params)
    assert out.shape == (N, F_l, H, W)
    # Tolerance accommodates MXU default-precision differences between the
    # in-kernel dots and XLA's reference contractions.
    assert jnp.allclose(out, ref, atol=1e-3, rtol=1e-3), "mismatch vs reference"

    print("KERNEL_OK")
</pallas_src>

<mosaic_0001>
module attributes {stable_mosaic.version = 11 : i64} {
  func.func @kernel(%arg0: i32, %arg1: i32, %arg2: memref<1x8x256xf32, #tpu.memory_space<vmem>>, %arg3: memref<1x8x256xf32, #tpu.memory_space<vmem>>, %arg4: memref<16x16xf32, #tpu.memory_space<vmem>>, %arg5: memref<16x1xf32, #tpu.memory_space<vmem>>, %arg6: memref<1x16xf32, #tpu.memory_space<vmem>>, %arg7: memref<1x1xf32, #tpu.memory_space<smem>>, %arg8: memref<1x8x256xf32, #tpu.memory_space<vmem>>) attributes {dimension_semantics = [#tpu.dimension_semantics<parallel>, #tpu.dimension_semantics<parallel>], iteration_bounds = array<i64: 2, 1>, scalar_prefetch = 0 : i64, scratch_operands = 0 : i64, tpu.core_type = #tpu.core_type<tc>, window_params = [{transform_indices = @transform_0, window_bounds = array<i64: 1, 8, 256>}, {transform_indices = @transform_1, window_bounds = array<i64: 1, 8, 256>}, {pipeline_mode = #tpu.pipeline_mode<synchronous>, transform_indices = @transform_2, window_bounds = array<i64: 16, 16>}, {pipeline_mode = #tpu.pipeline_mode<synchronous>, transform_indices = @transform_3, window_bounds = array<i64: 16, 1>}, {pipeline_mode = #tpu.pipeline_mode<synchronous>, transform_indices = @transform_4, window_bounds = array<i64: 1, 16>}, {transform_indices = @transform_5, window_bounds = array<i64: 1, 1>}, {transform_indices = @transform_6, window_bounds = array<i64: 1, 8, 256>}]} {
    %c0 = arith.constant 0 : index
    %c0_0 = arith.constant 0 : index
    %c0_1 = arith.constant 0 : index
    %0 = vector.load %arg2[%c0, %c0_0, %c0_1] : memref<1x8x256xf32, #tpu.memory_space<vmem>>, vector<1x8x256xf32>
    %1 = vector.shape_cast %0 : vector<1x8x256xf32> to vector<8x256xf32>
    %c0_2 = arith.constant 0 : index
    %c0_3 = arith.constant 0 : index
    %c0_4 = arith.constant 0 : index
    %2 = vector.load %arg3[%c0_2, %c0_3, %c0_4] : memref<1x8x256xf32, #tpu.memory_space<vmem>>, vector<1x8x256xf32>
    %3 = vector.shape_cast %2 : vector<1x8x256xf32> to vector<8x256xf32>
    %4 = tpu.concatenate %1, %3 in 0 : vector<8x256xf32>, vector<8x256xf32> -> vector<16x256xf32>
    %c0_5 = arith.constant 0 : index
    %c0_6 = arith.constant 0 : index
    %5 = vector.load %arg4[%c0_5, %c0_6] : memref<16x16xf32, #tpu.memory_space<vmem>>, vector<16x16xf32>
    %cst = arith.constant dense<0.000000e+00> : vector<16x256xf32>
    %6 = tpu.matmul %5, %4, %cst {dimension_numbers = #tpu.dot_dimension_numbers<[1], [0], [0], [1], [0, 0, 1, 1], [], []>} : vector<16x16xf32>, vector<16x256xf32>, vector<16x256xf32> -> vector<16x256xf32>
    %c0_7 = arith.constant 0 : index
    %c0_8 = arith.constant 0 : index
    %7 = vector.load %arg5[%c0_7, %c0_8] : memref<16x1xf32, #tpu.memory_space<vmem>>, vector<16x1xf32>
    %8 = vector.broadcast %7 : vector<16x1xf32> to vector<16x256xf32>
    %9 = arith.addf %6, %8 : vector<16x256xf32>
    %cst_9 = arith.constant 0.000000e+00 : f32
    %10 = vector.broadcast %cst_9 : f32 to vector<16x256xf32>
    %11 = arith.maximumf %9, %10 : vector<16x256xf32>
    %c0_10 = arith.constant 0 : index
    %c0_11 = arith.constant 0 : index
    %12 = vector.load %arg6[%c0_10, %c0_11] : memref<1x16xf32, #tpu.memory_space<vmem>>, vector<1x16xf32>
    %cst_12 = arith.constant dense<0.000000e+00> : vector<1x256xf32>
    %13 = tpu.matmul %12, %11, %cst_12 {dimension_numbers = #tpu.dot_dimension_numbers<[1], [0], [0], [1], [0, 0, 1, 1], [], []>} : vector<1x16xf32>, vector<16x256xf32>, vector<1x256xf32> -> vector<1x256xf32>
    %c0_13 = arith.constant 0 : index
    %c0_14 = arith.constant 0 : index
    %14 = memref.load %arg7[%c0_13, %c0_14] : memref<1x1xf32, #tpu.memory_space<smem>>
    %15 = vector.broadcast %14 : f32 to vector<1x256xf32>
    %16 = arith.addf %13, %15 : vector<1x256xf32>
    %17 = arith.negf %16 : vector<1x256xf32>
    %18 = math.exp %17 : vector<1x256xf32>
    %cst_15 = arith.constant 1.000000e+00 : f32
    %19 = vector.broadcast %cst_15 : f32 to vector<1x256xf32>
    %20 = arith.addf %19, %18 : vector<1x256xf32>
    %21 = arith.divf %19, %20 : vector<1x256xf32>
    %22 = vector.broadcast %21 : vector<1x256xf32> to vector<8x256xf32>
    %23 = arith.mulf %3, %22 : vector<8x256xf32>
    %c0_16 = arith.constant 0 : index
    %c0_17 = arith.constant 0 : index
    %c0_18 = arith.constant 0 : index
    %24 = vector.load %arg8[%c0_16, %c0_17, %c0_18] : memref<1x8x256xf32, #tpu.memory_space<vmem>>, vector<1x8x256xf32>
    %25 = vector.shape_cast %24 : vector<1x8x256xf32> to vector<8x256xf32>
    %26 = vector.shape_cast %23 : vector<8x256xf32> to vector<1x8x256xf32>
    tpu.vector_store %arg8[%c0_16, %c0_17, %c0_18], %26 {strides = array<i32>} : memref<1x8x256xf32, #tpu.memory_space<vmem>>, vector<1x8x256xf32>,
    return
  }
  func.func @transform_0(%arg0: i32, %arg1: i32) -> (i32, i32, i32) {
    %c0_i32 = arith.constant 0 : i32
    %c0_i32_0 = arith.constant 0 : i32
    return %arg0, %c0_i32, %arg1 : i32, i32, i32
  }
  func.func @transform_1(%arg0: i32, %arg1: i32) -> (i32, i32, i32) {
    %c0_i32 = arith.constant 0 : i32
    %c0_i32_0 = arith.constant 0 : i32
    return %arg0, %c0_i32, %arg1 : i32, i32, i32
  }
  func.func @transform_2(%arg0: i32, %arg1: i32) -> (i32, i32) {
    %c0_i32 = arith.constant 0 : i32
    %c0_i32_0 = arith.constant 0 : i32
    %c0_i32_1 = arith.constant 0 : i32
    return %c0_i32, %c0_i32_0 : i32, i32
  }
  func.func @transform_3(%arg0: i32, %arg1: i32) -> (i32, i32) {
    %c0_i32 = arith.constant 0 : i32
    %c0_i32_0 = arith.constant 0 : i32
    %c0_i32_1 = arith.constant 0 : i32
    return %c0_i32, %c0_i32_0 : i32, i32
  }
  func.func @transform_4(%arg0: i32, %arg1: i32) -> (i32, i32) {
    %c0_i32 = arith.constant 0 : i32
    %c0_i32_0 = arith.constant 0 : i32
    %c0_i32_1 = arith.constant 0 : i32
    return %c0_i32, %c0_i32_0 : i32, i32
  }
  func.func @transform_5(%arg0: i32, %arg1: i32) -> (i32, i32) {
    %c0_i32 = arith.constant 0 : i32
    %c0_i32_0 = arith.constant 0 : i32
    %c0_i32_1 = arith.constant 0 : i32
    return %c0_i32, %c0_i32_0 : i32, i32
  }
  func.func @transform_6(%arg0: i32, %arg1: i32) -> (i32, i32, i32) {
    %c0_i32 = arith.constant 0 : i32
    %c0_i32_0 = arith.constant 0 : i32
    return %arg0, %c0_i32, %arg1 : i32, i32, i32
  }
}

</mosaic_0001>

<llo_original>
// kernel: tpu_custom_call.1
$region0: #{tpu_custom_call.1}
  #allocation0 [shape = 'u32[]', space=smem, size = 0x4, offset = 0x4, fixed_abs, tag = 'smem constant byte address 0x4 - core index']
  #allocation1 [shape = 'u32[144,128]{1,0:T(1,128)}', space=vmem, size = 0x12000, scoped, tag = 'internal scratch']
  #allocation2 [shape = 'f32[1,1]{1,0:T(1,128)S(6)}', space=smem, size = 0x200, scoped, tag = 'scoped memory for tpu_custom_call.1']
  %s0 = inlined_call_operand.hbm [shape: f32[2,8,256], index: 0, kind: input, shape index: {}]
  %s1 = inlined_call_operand.hbm [shape: f32[2,8,256], index: 1, kind: input, shape index: {}]
  %s2 = inlined_call_operand.vmem [shape: f32[16,16], index: 2, kind: input, shape index: {}]
  %s3 = inlined_call_operand.vmem [shape: f32[16,1], index: 3, kind: input, shape index: {}]
  %s4 = inlined_call_operand.vmem [shape: f32[1,16], index: 4, kind: input, shape index: {}]
  %s5 = inlined_call_operand.<no memory space> [shape: f32[1,1], index: 5, kind: input, shape index: {}]
  %s6 = inlined_call_operand.hbm [shape: f32[2,8,256], index: 6, kind: output, shape index: {}]
  %s7 = sld [smem:[#allocation0]]
  $region65: #{tpu_custom_call.1} parent=0
    _
  %s9 = ssub.s32 1, %s7
  %s10 = scalar_select 0, %s9, %s7
  %11 = sst [smem:[#allocation2]] %s5
  $region1: #{tpu_custom_call.1} parent=0
    #allocation3 [shape = 'u8[16384]{0}', space=vmem, size = 0x4000, scoped, tag = 'input window, operand 0']
    #allocation4 [shape = 's32[2]{0}', space=sflag, size = 0x8, scoped, tag = 'scoped memory for tpu_custom_call.1']
    #allocation5 [shape = 's32[2]{0}', space=sflag, size = 0x8, scoped, tag = 'scoped memory for tpu_custom_call.1']
    #allocation6 [shape = 'u8[16384]{0}', space=vmem, size = 0x4000, scoped, tag = 'input window, operand 1']
    #allocation7 [shape = 's32[2]{0}', space=sflag, size = 0x8, scoped, tag = 'scoped memory for tpu_custom_call.1']
    #allocation8 [shape = 'u8[16384]{0}', space=vmem, size = 0x4000, scoped, tag = 'output window, operand 0']
    %12 = vsyncpa [#allocation4], 0
    %s13 = scalar_lea.sflag [#allocation4], 1
    %14 = vsyncpa %s13, 0
    %15 = vsyncpa [#allocation7], 0
    %s16 = scalar_lea.sflag [#allocation7], 1
    %17 = vsyncpa %s16, 0
    %18 = vsyncpa [#allocation5], 0
    %s19 = scalar_lea.sflag [#allocation5], 1
    %20 = vsyncpa %s19, 0
    loop: start=0, step=1, limit=4
    $region2: #{tpu_custom_call.1} parent=1 // loop_pre_header
      _
    $region3: #{tpu_custom_call.1} parent=1 // loop_header
      %s22 = sphi 0, %s26
      %p23 = scmp.ge.s32.totalorder %s22, 4
      %s29 = sphi 0, %s41
      %s30 = sphi 0, %s37
      %s31 = sphi 0, %s29
      %s32 = sphi 0, %s30
      %s33 = sphi 0, %s31
      %s34 = sphi 0, %s32
      %s46 = sphi 0, %s48
      %s49 = sphi 0, %s46
      %s50 = sphi 0, %s49
      %s66 = sphi 0, %s50
      %s74 = sphi 0, %s76
      %s77 = sphi 0, %s74
      %s78 = sphi 0, %s77
      %s94 = sphi 0, %s78
      %s98 = sphi 0, %s98
      %s100 = sphi 0, %s98
      %s101 = sphi 0, %s100
      %s115 = sphi 0, %s101
      %s119 = sphi 0, %s119
      %s121 = sphi 0, %s119
      %s122 = sphi 0, %s121
      %s136 = sphi 0, %s122
      %s140 = sphi 0, %s140
      %s142 = sphi 0, %s140
      %s143 = sphi 0, %s142
      %s157 = sphi 0, %s143
      %s161 = sphi 0, %s161
      %s163 = sphi 0, %s161
      %s164 = sphi 0, %s163
      %s178 = sphi 0, %s164
      %s186 = sphi 0, %s188
      %s189 = sphi 0, %s186
      %s190 = sphi 0, %s189
      %s206 = sphi 0, %s190
    $region4: #{tpu_custom_call.1} parent=1 // loop_header_branch
      %25 = sbr.rel (%p23) target = $region8
    $region5: #{tpu_custom_call.1} parent=1 // loop_body
      %s27 = ssub.s32 %s22, 1
      %s28 = ssub.s32 %s22, 2
      %s35 = sadd.s32 1, %s30
      %p36 = scmp.ge.s32.totalorder %s35, 1
      %s37 = scalar_select %p36, 0, %s35
      %s38 = sadd.s32 1, %s29
      %s39 = scalar_select %p36, %s38, %s29
      %p40 = scmp.ge.s32.totalorder %s39, 2
      %s41 = scalar_select %p40, 0, %s39
      %s42 = ssub.s32 %s29, %s41
      %s43 = ssub.s32 %s30, %s37
      %s44 = sor.u32 %s42, %s43
      %p45 = scmp.eq.s32.totalorder %s44, 0
      %s47 = sadd.s32 %s46, 1
      %s48 = scalar_select %p45, %s46, %s47
      %p51 = pneg %p45
      %p52 = scmp.eq.s32.totalorder %s22, 1
      %p53 = por %p51, %p52
      %p54 = scmp.ne.s32.totalorder %s46, %s49
      %p55 = scmp.eq.s32.totalorder %s22, 0
      %p56 = por %p54, %p55
      %p57 = scmp.ne.s32.totalorder %s46, %s49
      %p58 = scmp.eq.s32.totalorder %s27, 1
      %p59 = por %p57, %p58
      %p60 = scmp.ne.s32.totalorder %s49, %s50
      %p61 = scmp.eq.s32.totalorder %s27, 0
      %p62 = por %p60, %p61
      %p63 = scmp.ne.s32.totalorder %s49, %s50
      %p64 = scmp.eq.s32.totalorder %s28, 1
      %p65 = por %p63, %p64
      %p67 = scmp.ne.s32.totalorder %s50, %s66
      %p68 = scmp.eq.s32.totalorder %s28, 0
      %p69 = por %p67, %p68
      %s70 = ssub.s32 %s29, %s41
      %s71 = ssub.s32 %s30, %s37
      %s72 = sor.u32 %s70, %s71
      %p73 = scmp.eq.s32.totalorder %s72, 0
      %s75 = sadd.s32 %s74, 1
      %s76 = scalar_select %p73, %s74, %s75
      %p79 = pneg %p73
      %p80 = scmp.eq.s32.totalorder %s22, 1
      %p81 = por %p79, %p80
      %p82 = scmp.ne.s32.totalorder %s74, %s77
      %p83 = scmp.eq.s32.totalorder %s22, 0
      %p84 = por %p82, %p83
      %p85 = scmp.ne.s32.totalorder %s74, %s77
      %p86 = scmp.eq.s32.totalorder %s27, 1
      %p87 = por %p85, %p86
      %p88 = scmp.ne.s32.totalorder %s77, %s78
      %p89 = scmp.eq.s32.totalorder %s27, 0
      %p90 = por %p88, %p89
      %p91 = scmp.ne.s32.totalorder %s77, %s78
      %p92 = scmp.eq.s32.totalorder %s28, 1
      %p93 = por %p91, %p92
      %p95 = scmp.ne.s32.totalorder %s78, %s94
      %p96 = scmp.eq.s32.totalorder %s28, 0
      %p97 = por %p95, %p96
      %s99 = sadd.s32 %s98, 1
      %p102 = scmp.eq.s32.totalorder %s22, 1
      %p103 = scmp.ne.s32.totalorder %s98, %s100
      %p104 = scmp.eq.s32.totalorder %s22, 0
      %p105 = por %p103, %p104
      %p106 = scmp.ne.s32.totalorder %s98, %s100
      %p107 = scmp.eq.s32.totalorder %s27, 1
      %p108 = por %p106, %p107
      %p109 = scmp.ne.s32.totalorder %s100, %s101
      %p110 = scmp.eq.s32.totalorder %s27, 0
      %p111 = por %p109, %p110
      %p112 = scmp.ne.s32.totalorder %s100, %s101
      %p113 = scmp.eq.s32.totalorder %s28, 1
      %p114 = por %p112, %p113
      %p116 = scmp.ne.s32.totalorder %s101, %s115
      %p117 = scmp.eq.s32.totalorder %s28, 0
      %p118 = por %p116, %p117
      %s120 = sadd.s32 %s119, 1
      %p123 = scmp.eq.s32.totalorder %s22, 1
      %p124 = scmp.ne.s32.totalorder %s119, %s121
      %p125 = scmp.eq.s32.totalorder %s22, 0
      %p126 = por %p124, %p125
      %p127 = scmp.ne.s32.totalorder %s119, %s121
      %p128 = scmp.eq.s32.totalorder %s27, 1
      %p129 = por %p127, %p128
      %p130 = scmp.ne.s32.totalorder %s121, %s122
      %p131 = scmp.eq.s32.totalorder %s27, 0
      %p132 = por %p130, %p131
      %p133 = scmp.ne.s32.totalorder %s121, %s122
      %p134 = scmp.eq.s32.totalorder %s28, 1
      %p135 = por %p133, %p134
      %p137 = scmp.ne.s32.totalorder %s122, %s136
      %p138 = scmp.eq.s32.totalorder %s28, 0
      %p139 = por %p137, %p138
      %s141 = sadd.s32 %s140, 1
      %p144 = scmp.eq.s32.totalorder %s22, 1
      %p145 = scmp.ne.s32.totalorder %s140, %s142
      %p146 = scmp.eq.s32.totalorder %s22, 0
      %p147 = por %p145, %p146
      %p148 = scmp.ne.s32.totalorder %s140, %s142
      %p149 = scmp.eq.s32.totalorder %s27, 1
      %p150 = por %p148, %p149
      %p151 = scmp.ne.s32.totalorder %s142, %s143
      %p152 = scmp.eq.s32.totalorder %s27, 0
      %p153 = por %p151, %p152
      %p154 = scmp.ne.s32.totalorder %s142, %s143
      %p155 = scmp.eq.s32.totalorder %s28, 1
      %p156 = por %p154, %p155
      %p158 = scmp.ne.s32.totalorder %s143, %s157
      %p159 = scmp.eq.s32.totalorder %s28, 0
      %p160 = por %p158, %p159
      %s162 = sadd.s32 %s161, 1
      %p165 = scmp.eq.s32.totalorder %s22, 1
      %p166 = scmp.ne.s32.totalorder %s161, %s163
      %p167 = scmp.eq.s32.totalorder %s22, 0
      %p168 = por %p166, %p167
      %p169 = scmp.ne.s32.totalorder %s161, %s163
      %p170 = scmp.eq.s32.totalorder %s27, 1
      %p171 = por %p169, %p170
      %p172 = scmp.ne.s32.totalorder %s163, %s164
      %p173 = scmp.eq.s32.totalorder %s27, 0
      %p174 = por %p172, %p173
      %p175 = scmp.ne.s32.totalorder %s163, %s164
      %p176 = scmp.eq.s32.totalorder %s28, 1
      %p177 = por %p175, %p176
      %p179 = scmp.ne.s32.totalorder %s164, %s178
      %p180 = scmp.eq.s32.totalorder %s28, 0
      %p181 = por %p179, %p180
      %s182 = ssub.s32 %s29, %s41
      %s183 = ssub.s32 %s30, %s37
      %s184 = sor.u32 %s182, %s183
      %p185 = scmp.eq.s32.totalorder %s184, 0
      %s187 = sadd.s32 %s186, 1
      %s188 = scalar_select %p185, %s186, %s187
      %p191 = pneg %p185
      %p192 = scmp.eq.s32.totalorder %s22, 1
      %p193 = por %p191, %p192
      %p194 = scmp.ne.s32.totalorder %s186, %s189
      %p195 = scmp.eq.s32.totalorder %s22, 0
      %p196 = por %p194, %p195
      %p197 = scmp.ne.s32.totalorder %s186, %s189
      %p198 = scmp.eq.s32.totalorder %s27, 1
      %p199 = por %p197, %p198
      %p200 = scmp.ne.s32.totalorder %s189, %s190
      %p201 = scmp.eq.s32.totalorder %s27, 0
      %p202 = por %p200, %p201
      %p203 = scmp.ne.s32.totalorder %s189, %s190
      %p204 = scmp.eq.s32.totalorder %s28, 1
      %p205 = por %p203, %p204
      %p207 = scmp.ne.s32.totalorder %s190, %s206
      %p208 = scmp.eq.s32.totalorder %s28, 0
      %p209 = por %p207, %p208
      %p210 = scmp.le.s32.totalorder 1, %s22
      %p211 = scmp.lt.s32.totalorder %s22, 3
      %p212 = pnand %p210, %p211
      %p213 = pneg %p212
      // Predicated region
      $region9: #{tpu_custom_call.1} parent=5 // pred_check
        _
      $region10: #{tpu_custom_call.1} parent=5 // pred_check_branch
        %215 = sbr.rel (%p212) target = $region12
      $region11: #{tpu_custom_call.1} parent=5 // pred_region
        %s216 = ssub.s32 %s22, 1
        // Predicated region
        $region13: #{tpu_custom_call.1} parent=11 // pred_check
          %p217 = pneg %p111
        $region14: #{tpu_custom_call.1} parent=11 // pred_check_branch
          %219 = sbr.rel (%p217) target = $region16
        $region15: #{tpu_custom_call.1} parent=11 // pred_region
          _
        $region16: #{tpu_custom_call.1} parent=11 // pred_fallthru
          _
        // Predicated region
        $region17: #{tpu_custom_call.1} parent=11 // pred_check
          %p220 = pneg %p132
        $region18: #{tpu_custom_call.1} parent=11 // pred_check_branch
          %222 = sbr.rel (%p220) target = $region20
        $region19: #{tpu_custom_call.1} parent=11 // pred_region
          _
        $region20: #{tpu_custom_call.1} parent=11 // pred_fallthru
          _
        // Predicated region
        $region21: #{tpu_custom_call.1} parent=11 // pred_check
          %p223 = pneg %p153
        $region22: #{tpu_custom_call.1} parent=11 // pred_check_branch
          %225 = sbr.rel (%p223) target = $region24
        $region23: #{tpu_custom_call.1} parent=11 // pred_region
          _
        $region24: #{tpu_custom_call.1} parent=11 // pred_fallthru
          _
        // Predicated region
        $region25: #{tpu_custom_call.1} parent=11 // pred_check
          %p226 = pneg %p174
        $region26: #{tpu_custom_call.1} parent=11 // pred_check_branch
          %228 = sbr.rel (%p226) target = $region28
        $region27: #{tpu_custom_call.1} parent=11 // pred_region
          _
        $region28: #{tpu_custom_call.1} parent=11 // pred_fallthru
          _
      $region12: #{tpu_custom_call.1} parent=5 // pred_fallthru
        _
      %p229 = scmp.lt.s32.totalorder %s22, 2
      // Predicated region
      $region29: #{tpu_custom_call.1} parent=5 // pred_check
        %p230 = pneg %p229
      $region30: #{tpu_custom_call.1} parent=5 // pred_check_branch
        %232 = sbr.rel (%p230) target = $region32
      $region31: #{tpu_custom_call.1} parent=5 // pred_region
        // Predicated region
        $region33: #{tpu_custom_call.1} parent=31 // pred_check
          %p233 = pneg %p56
        $region34: #{tpu_custom_call.1} parent=31 // pred_check_branch
          %235 = sbr.rel (%p233) target = $region36
        $region35: #{tpu_custom_call.1} parent=31 // pred_region
          %s236 = sand.u32 %s46, 1
          %s237 = scalar_lea.sflag [#allocation4], %s236
          %s238 = sand.u32 %s46, 1
          %s239 = smul.addr %s238, 16
          %s240 = scalar_lea.vmem [#allocation3], %s239
          %s241 = smul.u32 2, %s30
          %s243 = ssub.s32 256, 256
          %244 = vsyncadd %s237, %s243
          %s245 = smul.addr %s29, 2
          %s246 = sadd.s32 %s241, %s245
          %s247 = smul.addr %s246, 128
          %s248 = scalar_lea.hbm %s0, %s247
          %s250 = sshll.u32 %s240, 4
          %s251 = int_to_ptr.vmem [resolvable:$true] %s250
          %253 = dma.hbm_to_vmem [thread:$0]  %s248, 256, %s251, %s237
        $region36: #{tpu_custom_call.1} parent=31 // pred_fallthru
          _
        // Predicated region
        $region37: #{tpu_custom_call.1} parent=31 // pred_check
          %p254 = pneg %p84
        $region38: #{tpu_custom_call.1} parent=31 // pred_check_branch
          %256 = sbr.rel (%p254) target = $region40
        $region39: #{tpu_custom_call.1} parent=31 // pred_region
          %s257 = sand.u32 %s74, 1
          %s258 = scalar_lea.sflag [#allocation7], %s257
          %s259 = sand.u32 %s74, 1
          %s260 = smul.addr %s259, 16
          %s261 = scalar_lea.vmem [#allocation6], %s260
          %s262 = smul.u32 2, %s30
          %s264 = ssub.s32 256, 256
          %265 = vsyncadd %s258, %s264
          %s266 = smul.addr %s29, 2
          %s267 = sadd.s32 %s262, %s266
          %s268 = smul.addr %s267, 128
          %s269 = scalar_lea.hbm %s1, %s268
          %s271 = sshll.u32 %s261, 4
          %s272 = int_to_ptr.vmem [resolvable:$true] %s271
          %274 = dma.hbm_to_vmem [thread:$0]  %s269, 256, %s272, %s258
        $region40: #{tpu_custom_call.1} parent=31 // pred_fallthru
          _
      $region32: #{tpu_custom_call.1} parent=5 // pred_fallthru
        _
      %p275 = scmp.le.s32.totalorder 1, %s22
      %p276 = scmp.lt.s32.totalorder %s22, 3
      %p277 = pnand %p275, %p276
      %p278 = pneg %p277
      // Predicated region
      $region41: #{tpu_custom_call.1} parent=5 // pred_check
        _
      $region42: #{tpu_custom_call.1} parent=5 // pred_check_branch
        %280 = sbr.rel (%p277) target = $region44
      $region43: #{tpu_custom_call.1} parent=5 // pred_region
        %s281 = ssub.s32 %s22, 1
        %s282 = sand.u32 %s49, 1
        %s283 = scalar_lea.sflag [#allocation4], %s282
        %s284 = sand.u32 %s49, 1
        %s285 = smul.addr %s284, 16
        %s286 = scalar_lea.vmem [#allocation3], %s285
        // Predicated region
        $region45: #{tpu_custom_call.1} parent=43 // pred_check
          %p287 = pneg %p62
        $region46: #{tpu_custom_call.1} parent=43 // pred_check_branch
          %289 = sbr.rel (%p287) target = $region48
        $region47: #{tpu_custom_call.1} parent=43 // pred_region
          %290 = dma.done %s283, 256
        $region48: #{tpu_custom_call.1} parent=43 // pred_fallthru
          _
        %s291 = sand.u32 %s77, 1
        %s292 = scalar_lea.sflag [#allocation7], %s291
        %s293 = sand.u32 %s77, 1
        %s294 = smul.addr %s293, 16
        %s295 = scalar_lea.vmem [#allocation6], %s294
        // Predicated region
        $region49: #{tpu_custom_call.1} parent=43 // pred_check
          %p296 = pneg %p90
        $region50: #{tpu_custom_call.1} parent=43 // pred_check_branch
          %298 = sbr.rel (%p296) target = $region52
        $region51: #{tpu_custom_call.1} parent=43 // pred_region
          %299 = dma.done %s292, 256
        $region52: #{tpu_custom_call.1} parent=43 // pred_fallthru
          _
        %s300 = sand.u32 %s49, 1
        %s301 = scalar_lea.sflag [#allocation4], %s300
        %s302 = sand.u32 %s49, 1
        %s303 = smul.addr %s302, 16
        %s304 = scalar_lea.vmem [#allocation3], %s303
        %p305 = pneg %p62
        %p306 = pneg %p59
        %s307 = sand.u32 %s77, 1
        %s308 = scalar_lea.sflag [#allocation7], %s307
        %s309 = sand.u32 %s77, 1
        %s310 = smul.addr %s309, 16
        %s311 = scalar_lea.vmem [#allocation6], %s310
        %p312 = pneg %p90
        %p313 = pneg %p87
        %p314 = pneg %p111
        %p315 = pneg %p108
        %p316 = pneg %p132
        %p317 = pneg %p129
        %p318 = pneg %p153
        %p319 = pneg %p150
        %p320 = pneg %p174
        %p321 = pneg %p171
        %p322 = pneg %p202
        %p323 = pneg %p199
        %s324 = sand.u32 %s189, 1
        %s325 = scalar_lea.sflag [#allocation5], %s324
        %s326 = sand.u32 %s189, 1
        %s327 = smul.addr %s326, 16
        %s328 = scalar_lea.vmem [#allocation8], %s327
        %s329 = smul.u32 2, %s32
        %s330 = smul.u32 2, %s32
        %s331 = smul.u32 2, %s32
        %v332 = vld [vmem:[%s286] sm:$0xff]
        %v333 = vld [vmem:[%s286 + $0x8] sm:$0xff]
        %v334 = vld [vmem:[%s295] sm:$0xff]
        %v335 = vld [vmem:[%s295 + $0x8] sm:$0xff]
        %v336 = vld [vmem:[%s2] sm:$0xff]
        %v337 = vld [vmem:[%s2 + $0x8] sm:$0xff]
        %v338 = vld [vmem:[%s3] sm:$0xff]
        %v339 = vld [vmem:[%s3 + $0x8] sm:$0xff]
        %341 = vset.pattern.permute.xlu0 0
        %342 = vperm.xlu0 %341, %v338
        %v343 = vpop.permute.xlu0 %342
        %346 = vset.pattern.permute.xlu0 0
        %347 = vperm.xlu0 %346, %v339
        %v348 = vpop.permute.xlu0 %347
        %vm350 = vcmask 130048
        %v352 = vsel %vm350, %v336, 0
        %v355 = vsel %vm350, %v337, 0
        %357 = vmatprep.subr.mxu0 %v333
        %358 = vmatpush1.msra.mxu0 %v332
        %359 = vmatprep.subr.mxu0 %v335
        %360 = vmatpush1.msra.mxu0 %v334
        %361 = vmatprep.subr.mxu0 0.0
        %362 = vmatpush1.msra.mxu0 0.0
        %363 = vmatprep.subr.mxu0 0.0
        %364 = vmatpush1.msra.mxu0 0.0
        %365 = vmatprep.subr.mxu0 0.0
        %366 = vmatpush1.msra.mxu0 0.0
        %367 = vmatprep.subr.mxu0 0.0
        %368 = vmatpush1.msra.mxu0 0.0
        %369 = vmatprep.subr.mxu0 0.0
        %370 = vmatpush1.msra.mxu0 0.0
        %371 = vmatprep.subr.mxu0 0.0
        %372 = vmatpush1.msra.mxu0 0.0
        %373 = vmatprep.subr.mxu0 0.0
        %374 = vmatpush1.msra.mxu0 0.0
        %375 = vmatprep.subr.mxu0 0.0
        %376 = vmatpush1.msra.mxu0 0.0
        %377 = vmatprep.subr.mxu0 0.0
        %378 = vmatpush1.msra.mxu0 0.0
        %379 = vmatprep.subr.mxu0 0.0
        %380 = vmatpush1.msra.mxu0 0.0
        %381 = vmatprep.subr.mxu0 0.0
        %382 = vmatpush1.msra.mxu0 0.0
        %383 = vmatprep.subr.mxu0 0.0
        %384 = vmatpush1.msra.mxu0 0.0
        %385 = vmatprep.subr.mxu0 0.0
        %386 = vmatpush1.msra.mxu0 0.0
        %387 = vmatprep.subr.mxu0 0.0
        %388 = vmatpush1.msra.mxu0 0.0
        %389 = vmatprep.subr.mxu0 0.0
        %390 = vmatpush1.msra.mxu0 0.0
        %391 = vmatprep.subr.mxu0 0.0
        %392 = vmatpush1.msra.mxu0 0.0
        %393 = vmatprep.subr.mxu0 0.0
        %394 = vmatpush1.msra.mxu0 0.0
        %395 = vmatprep.subr.mxu0 0.0
        %396 = vmatpush1.msra.mxu0 0.0
        %397 = vmatprep.subr.mxu0 0.0
        %398 = vmatpush1.msra.mxu0 0.0
        %399 = vmatprep.subr.mxu0 0.0
        %400 = vmatpush1.msra.mxu0 0.0
        %401 = vmatprep.subr.mxu0 0.0
        %402 = vmatpush1.msra.mxu0 0.0
        %403 = vmatprep.subr.mxu0 0.0
        %404 = vmatpush1.msra.mxu0 0.0
        %405 = vmatprep.subr.mxu0 0.0
        %406 = vmatpush1.msra.mxu0 0.0
        %407 = vmatprep.subr.mxu0 0.0
        %408 = vmatpush1.msra.mxu0 0.0
        %409 = vmatprep.subr.mxu0 0.0
        %410 = vmatpush1.msra.mxu0 0.0
        %411 = vmatprep.subr.mxu0 0.0
        %412 = vmatpush1.msra.mxu0 0.0
        %413 = vmatprep.subr.mxu0 0.0
        %414 = vmatpush1.msra.mxu0 0.0
        %415 = vmatprep.subr.mxu0 0.0
        %416 = vmatpush1.msra.mxu0 0.0
        %417 = vmatprep.subr.mxu0 0.0
        %418 = vmatpush1.msra.mxu0 0.0
        %419 = vmatprep.subr.mxu0 0.0
        %420 = vmatpush1.msra.mxu0 0.0
        %421 = vmatprep.mubr.f32.mxu0 0.0
        %422 = vmatmul.mubr.f32.gmra.mrb[0].mxu0 %v352
        %v423 = vpop.f32.mrb[0].mxu0
        %v424 = vadd.f32 %v343, %v423
        %v425 = vpop.f32.mrb[0].mxu0
        %v426 = vadd.f32 %v343, %v425
        %427 = vmatprep.mubr.f32.mxu0 0.0
        %428 = vmatmul.mubr.f32.gmra.mrb[0].mxu0 %v355
        %v429 = vpop.f32.mrb[0].mxu0
        %v430 = vadd.f32 %v348, %v429
        %v431 = vpop.f32.mrb[0].mxu0
        %v432 = vadd.f32 %v348, %v431
        %433 = vdwg.mxu0
        %v434 = vmax.f32 %v424, 0.0
        %v435 = vmax.f32 %v426, 0.0
        %v436 = vmax.f32 %v430, 0.0
        %v437 = vmax.f32 %v432, 0.0
        %v438 = vld [vmem:[%s4] sm:$0x1]
        %s439 = sld [smem:[#allocation2]]
        %v440 = vstv %s439
        %v442 = vsel %vm350, %v438, 0
        %444 = vmatprep.subr.mxu0 %v435
        %445 = vmatpush1.msra.mxu0 %v434
        %446 = vmatprep.subr.mxu0 %v437
        %447 = vmatpush1.msra.mxu0 %v436
        %448 = vmatprep.subr.mxu0 0.0
        %449 = vmatpush1.msra.mxu0 0.0
        %450 = vmatprep.subr.mxu0 0.0
        %451 = vmatpush1.msra.mxu0 0.0
        %452 = vmatprep.subr.mxu0 0.0
        %453 = vmatpush1.msra.mxu0 0.0
        %454 = vmatprep.subr.mxu0 0.0
        %455 = vmatpush1.msra.mxu0 0.0
        %456 = vmatprep.subr.mxu0 0.0
        %457 = vmatpush1.msra.mxu0 0.0
        %458 = vmatprep.subr.mxu0 0.0
        %459 = vmatpush1.msra.mxu0 0.0
        %460 = vmatprep.subr.mxu0 0.0
        %461 = vmatpush1.msra.mxu0 0.0
        %462 = vmatprep.subr.mxu0 0.0
        %463 = vmatpush1.msra.mxu0 0.0
        %464 = vmatprep.subr.mxu0 0.0
        %465 = vmatpush1.msra.mxu0 0.0
        %466 = vmatprep.subr.mxu0 0.0
        %467 = vmatpush1.msra.mxu0 0.0
        %468 = vmatprep.subr.mxu0 0.0
        %469 = vmatpush1.msra.mxu0 0.0
        %470 = vmatprep.subr.mxu0 0.0
        %471 = vmatpush1.msra.mxu0 0.0
        %472 = vmatprep.subr.mxu0 0.0
        %473 = vmatpush1.msra.mxu0 0.0
        %474 = vmatprep.subr.mxu0 0.0
        %475 = vmatpush1.msra.mxu0 0.0
        %476 = vmatprep.subr.mxu0 0.0
        %477 = vmatpush1.msra.mxu0 0.0
        %478 = vmatprep.subr.mxu0 0.0
        %479 = vmatpush1.msra.mxu0 0.0
        %480 = vmatprep.subr.mxu0 0.0
        %481 = vmatpush1.msra.mxu0 0.0
        %482 = vmatprep.subr.mxu0 0.0
        %483 = vmatpush1.msra.mxu0 0.0
        %484 = vmatprep.subr.mxu0 0.0
        %485 = vmatpush1.msra.mxu0 0.0
        %486 = vmatprep.subr.mxu0 0.0
        %487 = vmatpush1.msra.mxu0 0.0
        %488 = vmatprep.subr.mxu0 0.0
        %489 = vmatpush1.msra.mxu0 0.0
        %490 = vmatprep.subr.mxu0 0.0
        %491 = vmatpush1.msra.mxu0 0.0
        %492 = vmatprep.subr.mxu0 0.0
        %493 = vmatpush1.msra.mxu0 0.0
        %494 = vmatprep.subr.mxu0 0.0
        %495 = vmatpush1.msra.mxu0 0.0
        %496 = vmatprep.subr.mxu0 0.0
        %497 = vmatpush1.msra.mxu0 0.0
        %498 = vmatprep.subr.mxu0 0.0
        %499 = vmatpush1.msra.mxu0 0.0
        %500 = vmatprep.subr.mxu0 0.0
        %501 = vmatpush1.msra.mxu0 0.0
        %502 = vmatprep.subr.mxu0 0.0
        %503 = vmatpush1.msra.mxu0 0.0
        %504 = vmatprep.subr.mxu0 0.0
        %505 = vmatpush1.msra.mxu0 0.0
        %506 = vmatprep.subr.mxu0 0.0
        %507 = vmatpush1.msra.mxu0 0.0
        %508 = vmatprep.mubr.f32.mxu0 0.0
        %509 = vmatmul.mubr.f32.gmra.mrb[0].mxu0 %v442
        %v510 = vpop.f32.mrb[0].mxu0
        %v511 = vadd.f32 %v440, %v510
        %v512 = vpop.f32.mrb[0].mxu0
        %v513 = vadd.f32 %v440, %v512
        %514 = vdwg.mxu0
        %v515 = vxor.u32 %v511, 2147483648
        %v516 = vxor.u32 %v513, 2147483648
        %v517 = vmul.f32 %v515, 1.442695
        %v518 = vpow.pop %v517
        %v519 = vmul.f32 %v516, 1.442695
        %v520 = vpow.pop %v519
        %v521 = vadd.f32 %v518, 1.0
        %v522 = vadd.f32 %v520, 1.0
        %v523 = vrcp.pop %v521
        %v524 = vmul.f32 1.0, %v523
        %v525 = vrcp.pop %v522
        %v526 = vmul.f32 1.0, %v525
        %v527 = vlaneseq
        %v528 = vshrl.u32 %v527, 7
        %v529 = vsub.s32 0, %v528
        %v530 = vrot.slane %v524, %v529
        %v531 = vlaneseq
        %v532 = vshrl.u32 %v531, 7
        %v533 = vsub.s32 0, %v532
        %v534 = vrot.slane %v526, %v533
        %v535 = vmul.f32 %v334, %v530
        %v536 = vmul.f32 %v335, %v534
        %537 = vst [vmem:[%s328] sm:$0xff] %v535
        %538 = vst [vmem:[%s328 + $0x8] sm:$0xff] %v536
        %s539 = sand.u32 %s189, 1
        %s540 = scalar_lea.sflag [#allocation5], %s539
        %s541 = sand.u32 %s189, 1
        %s542 = smul.addr %s541, 16
        %s543 = scalar_lea.vmem [#allocation8], %s542
        // Predicated region
        $region53: #{tpu_custom_call.1} parent=43 // pred_check
          %p544 = pneg %p199
        $region54: #{tpu_custom_call.1} parent=43 // pred_check_branch
          %546 = sbr.rel (%p544) target = $region56
        $region55: #{tpu_custom_call.1} parent=43 // pred_region
          %s547 = smul.u32 2, %s32
          %s549 = ssub.s32 256, 256
          %550 = vsyncadd %s540, %s549
          %s551 = smul.addr %s31, 2
          %s552 = sadd.s32 %s547, %s551
          %s553 = smul.addr %s552, 128
          %s554 = scalar_lea.hbm %s6, %s553
          %s556 = sshll.u32 %s543, 4
          %s557 = int_to_ptr.vmem [resolvable:$true] %s556
          %559 = dma.vmem_to_hbm [thread:$0]  %s557, 256, %s554, %s540
        $region56: #{tpu_custom_call.1} parent=43 // pred_fallthru
          _
      $region44: #{tpu_custom_call.1} parent=5 // pred_fallthru
        _
      %p560 = scmp.le.s32.totalorder 2, %s22
      // Predicated region
      $region57: #{tpu_custom_call.1} parent=5 // pred_check
        %p561 = pneg %p560
      $region58: #{tpu_custom_call.1} parent=5 // pred_check_branch
        %563 = sbr.rel (%p561) target = $region60
      $region59: #{tpu_custom_call.1} parent=5 // pred_region
        %s564 = ssub.s32 %s22, 2
        // Predicated region
        $region61: #{tpu_custom_call.1} parent=59 // pred_check
          %p565 = pneg %p205
        $region62: #{tpu_custom_call.1} parent=59 // pred_check_branch
          %567 = sbr.rel (%p565) target = $region64
        $region63: #{tpu_custom_call.1} parent=59 // pred_region
          %s568 = sand.u32 %s190, 1
          %s569 = scalar_lea.sflag [#allocation5], %s568
          %s570 = sand.u32 %s190, 1
          %s571 = smul.addr %s570, 16
          %s572 = scalar_lea.vmem [#allocation8], %s571
          %573 = dma.done %s569, 256
        $region64: #{tpu_custom_call.1} parent=59 // pred_fallthru
          _
      $region60: #{tpu_custom_call.1} parent=5 // pred_fallthru
        _
    $region6: #{tpu_custom_call.1} parent=1 // loop_footer
      %s26 = sadd.s32 1, %s22
    $region7: #{tpu_custom_call.1} parent=1 // loop_footer_branch
      %21 = sbr.rel target = $region3
    $region8: #{tpu_custom_call.1} parent=1 // loop_exit
      _
    %574 = vsyncpa [#allocation4], 1
    %s575 = scalar_lea.sflag [#allocation4], 1
    %576 = vsyncpa %s575, 1
    %577 = vsyncpa [#allocation7], 1
    %s578 = scalar_lea.sflag [#allocation7], 1
    %579 = vsyncpa %s578, 1
    %580 = vsyncpa [#allocation5], 1
    %s581 = scalar_lea.sflag [#allocation5], 1
    %582 = vsyncpa %s581, 1

</llo_original>
